<compile_context>
chip_gen: v6e
topology: v6e:2x2x1
jax: 0.10.0
libtpu: 0.0.40
codegen_flags: <defaults>
</compile_context>

<pallas_src>
import functools

import jax
import jax.numpy as jnp
from jax import lax
from jax.experimental import pallas as pl
from jax.experimental.pallas import tpu as pltpu


def _syncnet_loss_kernel(a_ref, m_ref, y_ref, o_ref, *, inv_b):
    # a_ref, m_ref: (B, D) in VMEM (native dtype)
    # y_ref:        (B, 1) in VMEM (native integer/float dtype)
    # o_ref:        (1, 1) in SMEM (f32 scalar loss)
    a = a_ref[...].astype(jnp.float32)
    m = m_ref[...].astype(jnp.float32)
    y = y_ref[...].astype(jnp.float32)      # label.float()

    eps = jnp.float32(1e-8)

    # VPU products + three independent XLU lane reductions (no concat copy).
    dot = jnp.sum(a * m, axis=-1, keepdims=True)   # (B, 1)
    sa2 = jnp.sum(a * a, axis=-1, keepdims=True)   # (B, 1)
    sm2 = jnp.sum(m * m, axis=-1, keepdims=True)   # (B, 1)

    # Cosine similarity: matches torch's (w1*w2).clamp_min(eps^2).rsqrt() (EUP rsqrt).
    inv = lax.rsqrt(jnp.maximum(sa2 * sm2, eps * eps))
    cos = dot * inv

    # Map to [0, 1]; clamp so f32 rounding can never feed log() a negative argument.
    p = jnp.clip((cos + 1.0) * 0.5, 0.0, 1.0)

    # BCE with PyTorch's log clamp at -100; full blend so soft targets also match.
    log_p = jnp.maximum(jnp.log(p), -100.0)
    log_1mp = jnp.maximum(jnp.log(1.0 - p), -100.0)
    per_sample = y * log_p + (1.0 - y) * log_1mp   # (B, 1)

    # Mean reduction, written out as a scalar through SMEM.
    o_ref[0, 0] = -jnp.sum(per_sample) * inv_b


def syncnet_loss(audio_embedding, mouth_embedding, label):
    """audio_embedding, mouth_embedding: (B, D); label: (B,). Returns scalar loss."""
    B, D = audio_embedding.shape
    # glue: label.view(-1, 1) — keep native dtype; float cast happens in-kernel.
    gt = label.reshape(B, 1)

    kernel = functools.partial(_syncnet_loss_kernel, inv_b=1.0 / B)

    # Only raise the scoped-VMEM limit if the (whole-array-resident) inputs are big
    # enough to threaten the default budget (e.g. v5e's 16 MiB). Never triggers at
    # typical SyncNet sizes.
    in_bytes = (audio_embedding.size * audio_embedding.dtype.itemsize
                + mouth_embedding.size * mouth_embedding.dtype.itemsize)
    compiler_params = None
    if in_bytes > (8 << 20):
        compiler_params = pltpu.CompilerParams(
            vmem_limit_bytes=min(int(4 * in_bytes) + (4 << 20), 100 << 20))

    out = pl.pallas_call(
        kernel,
        out_shape=jax.ShapeDtypeStruct((1, 1), jnp.float32),
        in_specs=[
            pl.BlockSpec(memory_space=pltpu.MemorySpace.VMEM),
            pl.BlockSpec(memory_space=pltpu.MemorySpace.VMEM),
            pl.BlockSpec(memory_space=pltpu.MemorySpace.VMEM),
        ],
        out_specs=pl.BlockSpec(memory_space=pltpu.MemorySpace.SMEM),
        compiler_params=compiler_params,
    )(audio_embedding, mouth_embedding, gt)
    return out[0, 0]


if __name__ == "__main__":
    key = jax.random.PRNGKey(0)
    k_a, k_m, k_l = jax.random.split(key, 3)

    B, D = 8, 32
    audio = jax.random.normal(k_a, (B, D), dtype=jnp.float32)
    mouth = jax.random.normal(k_m, (B, D), dtype=jnp.float32)
    label = jax.random.bernoulli(k_l, 0.5, (B,)).astype(jnp.int32)

    loss = syncnet_loss(audio, mouth, label)
    jax.block_until_ready(loss)

    # Pure-JAX reference mirroring the PyTorch module (modern ATen cosine_similarity:
    # clamp the PRODUCT of squared norms at eps^2, matching the kernel).
    def ref(a, m, y):
        a = a.astype(jnp.float32)
        m = m.astype(jnp.float32)
        dot = jnp.sum(a * m, axis=-1)
        w1 = jnp.sum(a * a, axis=-1)
        w2 = jnp.sum(m * m, axis=-1)
        cos = dot / jnp.sqrt(jnp.maximum(w1 * w2, jnp.float32(1e-8) ** 2))
        p = (cos + 1.0) / 2.0
        yf = y.astype(jnp.float32)
        return jnp.mean(-(yf * jnp.maximum(jnp.log(p), -100.0)
                          + (1.0 - yf) * jnp.maximum(jnp.log(1.0 - p), -100.0)))

    ref_loss = ref(audio, mouth, label)
    assert jnp.allclose(loss, ref_loss, atol=1e-5, rtol=1e-5), (loss, ref_loss)

    print("KERNEL_OK")
</pallas_src>

<mosaic_0001>
module attributes {stable_mosaic.version = 11 : i64} {
  func.func @_syncnet_loss_kernel(%arg0: memref<8x32xf32, #tpu.memory_space<vmem>>, %arg1: memref<8x32xf32, #tpu.memory_space<vmem>>, %arg2: memref<8x1xi32, #tpu.memory_space<vmem>>, %arg3: memref<1x1xf32, #tpu.memory_space<smem>>) attributes {dimension_semantics = [], scalar_prefetch = 0 : i64, scratch_operands = 0 : i64, tpu.core_type = #tpu.core_type<tc>} {
    %c0 = arith.constant 0 : index
    %c0_0 = arith.constant 0 : index
    %0 = vector.load %arg0[%c0, %c0_0] : memref<8x32xf32, #tpu.memory_space<vmem>>, vector<8x32xf32>
    %c0_1 = arith.constant 0 : index
    %c0_2 = arith.constant 0 : index
    %1 = vector.load %arg1[%c0_1, %c0_2] : memref<8x32xf32, #tpu.memory_space<vmem>>, vector<8x32xf32>
    %c0_3 = arith.constant 0 : index
    %c0_4 = arith.constant 0 : index
    %2 = vector.load %arg2[%c0_3, %c0_4] : memref<8x1xi32, #tpu.memory_space<vmem>>, vector<8x1xi32>
    %3 = arith.sitofp %2 : vector<8x1xi32> to vector<8x1xf32>
    %4 = arith.mulf %0, %1 : vector<8x32xf32>
    %cst = arith.constant dense<0.000000e+00> : vector<8xf32>
    %5 = vector.multi_reduction <add>, %4, %cst [1] : vector<8x32xf32> to vector<8xf32>
    %6 = vector.shape_cast %5 : vector<8xf32> to vector<8x1xf32>
    %7 = arith.mulf %0, %0 : vector<8x32xf32>
    %cst_5 = arith.constant dense<0.000000e+00> : vector<8xf32>
    %8 = vector.multi_reduction <add>, %7, %cst_5 [1] : vector<8x32xf32> to vector<8xf32>
    %9 = vector.shape_cast %8 : vector<8xf32> to vector<8x1xf32>
    %10 = arith.mulf %1, %1 : vector<8x32xf32>
    %cst_6 = arith.constant dense<0.000000e+00> : vector<8xf32>
    %11 = vector.multi_reduction <add>, %10, %cst_6 [1] : vector<8x32xf32> to vector<8xf32>
    %12 = vector.shape_cast %11 : vector<8xf32> to vector<8x1xf32>
    %13 = arith.mulf %9, %12 : vector<8x1xf32>
    %cst_7 = arith.constant 9.99999993E-9 : f32
    %cst_8 = arith.constant 9.99999993E-9 : f32
    %14 = arith.mulf %cst_7, %cst_8 : f32
    %15 = vector.broadcast %14 : f32 to vector<8x1xf32>
    %16 = arith.maximumf %13, %15 : vector<8x1xf32>
    %17 = math.rsqrt %16 : vector<8x1xf32>
    %18 = arith.mulf %6, %17 : vector<8x1xf32>
    %cst_9 = arith.constant 1.000000e+00 : f32
    %19 = vector.broadcast %cst_9 : f32 to vector<8x1xf32>
    %20 = arith.addf %18, %19 : vector<8x1xf32>
    %cst_10 = arith.constant 5.000000e-01 : f32
    %21 = vector.broadcast %cst_10 : f32 to vector<8x1xf32>
    %22 = arith.mulf %20, %21 : vector<8x1xf32>
    %cst_11 = arith.constant 0.000000e+00 : f32
    %cst_12 = arith.constant 1.000000e+00 : f32
    %23 = vector.broadcast %cst_11 : f32 to vector<8x1xf32>
    %24 = arith.maximumf %23, %22 : vector<8x1xf32>
    %25 = vector.broadcast %cst_12 : f32 to vector<8x1xf32>
    %26 = arith.minimumf %25, %24 : vector<8x1xf32>
    %27 = math.log %26 : vector<8x1xf32>
    %cst_13 = arith.constant -1.000000e+02 : f32
    %28 = vector.broadcast %cst_13 : f32 to vector<8x1xf32>
    %29 = arith.maximumf %27, %28 : vector<8x1xf32>
    %cst_14 = arith.constant 1.000000e+00 : f32
    %30 = vector.broadcast %cst_14 : f32 to vector<8x1xf32>
    %31 = arith.subf %30, %26 : vector<8x1xf32>
    %32 = math.log %31 : vector<8x1xf32>
    %cst_15 = arith.constant -1.000000e+02 : f32
    %33 = vector.broadcast %cst_15 : f32 to vector<8x1xf32>
    %34 = arith.maximumf %32, %33 : vector<8x1xf32>
    %35 = arith.mulf %3, %29 : vector<8x1xf32>
    %cst_16 = arith.constant 1.000000e+00 : f32
    %36 = vector.broadcast %cst_16 : f32 to vector<8x1xf32>
    %37 = arith.subf %36, %3 : vector<8x1xf32>
    %38 = arith.mulf %37, %34 : vector<8x1xf32>
    %39 = arith.addf %35, %38 : vector<8x1xf32>
    %40 = vector.shape_cast %39 : vector<8x1xf32> to vector<1x8x1xf32>
    %cst_17 = arith.constant dense<0.000000e+00> : vector<1xf32>
    %41 = vector.multi_reduction <add>, %40, %cst_17 [1, 2] : vector<1x8x1xf32> to vector<1xf32>
    %42 = vector.shape_cast %41 : vector<1xf32> to vector<1x1x1xf32>
    %43 = vector.extract %42[0, 0, 0] : f32 from vector<1x1x1xf32>
    %cst_18 = arith.constant 0.000000e+00 : f32
    %44 = arith.subf %cst_18, %43 : f32
    %cst_19 = arith.constant 1.250000e-01 : f32
    %45 = arith.mulf %44, %cst_19 : f32
    %c0_20 = arith.constant 0 : index
    %c0_21 = arith.constant 0 : index
    %46 = memref.load %arg3[%c0_20, %c0_21] : memref<1x1xf32, #tpu.memory_space<smem>>
    memref.store %45, %arg3[%c0_20, %c0_21] : memref<1x1xf32, #tpu.memory_space<smem>>
    return
  }
}

</mosaic_0001>

<llo_original>
// kernel: tpu_custom_call.1
$region0: #{tpu_custom_call.1}
  #allocation0 [shape = 'u32[]', space=smem, size = 0x4, offset = 0x4, fixed_abs, tag = 'smem constant byte address 0x4 - core index']
  #allocation1 [shape = 'u32[144,128]{1,0:T(1,128)}', space=vmem, size = 0x12000, scoped, tag = 'internal scratch']
  %s0 = inlined_call_operand.vmem [shape: f32[8,32], index: 0, kind: input, shape index: {}]
  %s1 = inlined_call_operand.hbm [shape: f32[8,32], index: 1, kind: input, shape index: {}]
  %s2 = inlined_call_operand.vmem [shape: s32[8,1], index: 2, kind: input, shape index: {}]
  %s3 = inlined_call_operand.hbm [shape: f32[1,1], index: 3, kind: output, shape index: {}]
  %s4 = sld [smem:[#allocation0]]
  $region26: #{tpu_custom_call.1} parent=0
    _
  %s6 = ssub.s32 1, %s4
  %s7 = scalar_select 0, %s6, %s4
  $region1: #{tpu_custom_call.1} parent=0
    #allocation2 [shape = 'u8[4096]{0}', space=vmem, size = 0x1000, scoped, tag = 'input window, operand 1, single buffered']
    #allocation3 [shape = 's32[1]{0}', space=sflag, size = 0x4, scoped, tag = 'scoped memory for tpu_custom_call.1']
    #allocation4 [shape = 's32[1]{0}', space=sflag, size = 0x4, scoped, tag = 'scoped memory for tpu_custom_call.1']
    #allocation5 [shape = 'u8[512]{0}', space=smem, size = 0x200, scoped, tag = 'output window, operand 0, single buffered']
    %8 = vsyncpa [#allocation3], 0
    %9 = vsyncpa [#allocation4], 0
    // Predicated region
    $region2: #{tpu_custom_call.1} parent=1 // pred_check
      _
    $region3: #{tpu_custom_call.1} parent=1 // pred_check_branch
      %11 = sbr.rel (0) target = $region5
    $region4: #{tpu_custom_call.1} parent=1 // pred_region
      _
    $region5: #{tpu_custom_call.1} parent=1 // pred_fallthru
      _
    // Predicated region
    $region6: #{tpu_custom_call.1} parent=1 // pred_check
      _
    $region7: #{tpu_custom_call.1} parent=1 // pred_check_branch
      %13 = sbr.rel (0) target = $region9
    $region8: #{tpu_custom_call.1} parent=1 // pred_region
      %s15 = ssub.s32 128, 128
      %16 = vsyncadd [#allocation3], %s15
      %s18 = sshll.u32 [#allocation2], 4
      %s19 = int_to_ptr.vmem [resolvable:$true] %s18
      %21 = dma.hbm_to_vmem [thread:$0]  %s1, 128, %s19, [#allocation3]
    $region9: #{tpu_custom_call.1} parent=1 // pred_fallthru
      _
    // Predicated region
    $region10: #{tpu_custom_call.1} parent=1 // pred_check
      _
    $region11: #{tpu_custom_call.1} parent=1 // pred_check_branch
      %23 = sbr.rel (0) target = $region13
    $region12: #{tpu_custom_call.1} parent=1 // pred_region
      _
    $region13: #{tpu_custom_call.1} parent=1 // pred_fallthru
      _
    // Predicated region
    $region14: #{tpu_custom_call.1} parent=1 // pred_check
      _
    $region15: #{tpu_custom_call.1} parent=1 // pred_check_branch
      %25 = sbr.rel (0) target = $region17
    $region16: #{tpu_custom_call.1} parent=1 // pred_region
      %26 = dma.done [#allocation3], 128
    $region17: #{tpu_custom_call.1} parent=1 // pred_fallthru
      _
    %v27 = vld [vmem:[%s0] sm:$0xff]
    %v28 = vld [vmem:[#allocation2] sm:$0xff]
    %v29 = vld [vmem:[%s2] sm:$0xff]
    %v30 = vcvt.s32.f32 %v29
    %v31 = vmul.f32 %v27, %v28
    %vm32 = vcmask 261120
    %v33 = vsel %vm32, %v31, 0.0
    %34 = vadd.xlane.f32.xlu0 %v33
    %v35 = vpop.xlane.xlu0 %34
    %v36 = vmul.f32 %v27, %v27
    %v37 = vsel %vm32, %v36, 0.0
    %38 = vadd.xlane.f32.xlu0 %v37
    %v39 = vpop.xlane.xlu0 %38
    %v40 = vmul.f32 %v28, %v28
    %v41 = vsel %vm32, %v40, 0.0
    %42 = vadd.xlane.f32.xlu0 %v41
    %v43 = vpop.xlane.xlu0 %42
    %v44 = vmul.f32 %v39, %v43
    %v45 = vmax.f32 %v44, 1e-16
    %v46 = vrsqrt.pop %v45
    %v47 = vmul.f32 %v35, %v46
    %v48 = vadd.f32 %v47, 1.0
    %v49 = vmul.f32 %v48, 0.5
    %v50 = vmax.f32 %v49, 0.0
    %v51 = vmin.f32 %v50, 1.0
    %v52 = vlog2.pop %v51
    %v53 = vmul.f32 %v52, 0.6931472
    %v54 = vmax.f32 %v53, -100.0
    %v55 = vsub.f32 1.0, %v51
    %v56 = vlog2.pop %v55
    %v57 = vmul.f32 %v56, 0.6931472
    %v58 = vmax.f32 %v57, -100.0
    %v59 = vmul.f32 %v30, %v54
    %v60 = vsub.f32 1.0, %v30
    %v61 = vmul.f32 %v60, %v58
    %v62 = vadd.f32 %v59, %v61
    %vm63 = vcmask 7168
    %v64 = vsel %vm63, %v62, 0.0
    %65 = vadd.xlane.f32.xlu0 %v64
    %v66 = vpop.xlane.xlu0 %65
    %v67 = vrot.slane %v66, 4
    %v68 = vadd.f32 %v66, %v67
    %v69 = vrot.slane %v68, 2
    %v70 = vadd.f32 %v68, %v69
    %v71 = vrot.slane %v70, 1
    %v72 = vadd.f32 %v70, %v71
    %s73 = vtos %v72
    %s74 = ssub.f32 0.0, %s73
    %s75 = smul.f32 %s74, 0.125
    %s76 = scalar_lea.smem [#allocation5], 0
    %77 = sst [smem:[%s76]] %s75
    // Predicated region
    $region18: #{tpu_custom_call.1} parent=1 // pred_check
      _
    $region19: #{tpu_custom_call.1} parent=1 // pred_check_branch
      %79 = sbr.rel (0) target = $region21
    $region20: #{tpu_custom_call.1} parent=1 // pred_region
      %s81 = ssub.s32 16, 16
      %82 = vsyncadd [#allocation4], %s81
      %85 = dma.smem_to_hbm [#allocation5], 16, %s3, [#allocation4]
    $region21: #{tpu_custom_call.1} parent=1 // pred_fallthru
      _
    // Predicated region
    $region22: #{tpu_custom_call.1} parent=1 // pred_check
      _
    $region23: #{tpu_custom_call.1} parent=1 // pred_check_branch
      %87 = sbr.rel (0) target = $region25
    $region24: #{tpu_custom_call.1} parent=1 // pred_region
      %88 = dma.done [#allocation4], 16
    $region25: #{tpu_custom_call.1} parent=1 // pred_fallthru
      _
    %89 = sfence
    %90 = vsyncpa [#allocation3], 1
    %91 = vsyncpa [#allocation4], 1

</llo_original>
